<compile_context>
chip_gen: v6e
topology: v6e:2x2x1
jax: 0.10.0
libtpu: 0.0.40
codegen_flags: <defaults>
</compile_context>

<pallas_src>
import functools

import jax
import jax.numpy as jnp
from jax.experimental import pallas as pl
from jax.experimental.pallas import tpu as pltpu


def _round_up(x, m):
    return (x + m - 1) // m * m


def _vmem_limit_bytes():
    # Generation-aware scoped-VMEM cap (~75% of physical).  Fallback is the
    # smallest physical VMEM across generations (v7x: 64 MiB per TC).
    try:
        cap = int(pltpu.get_tpu_info().vmem_capacity_bytes)
    except Exception:
        cap = 64 * 1024 * 1024
    return int(cap * 3 // 4)


def _choose_tiles(B, in_f, out_f, *, bm=256, bn=512, bk=2048, sublane=8):
    """Pick (tm, tn, tk) and padded dims (Bp, Np, Kp)."""
    tm = min(bm, _round_up(B, sublane))
    tn = min(bn, _round_up(out_f, 128))
    tk = min(bk, _round_up(in_f, 128))

    Bp = _round_up(B, tm)
    Np = _round_up(out_f, tn)
    Kp = _round_up(in_f, tk)

    limit = _vmem_limit_bytes()

    # Conservative (4 B/elt) working-set estimate: double-buffered inputs and
    # output, f32 accumulator, the x*eps_in temporary, plus dot staging room.
    def need(tm_, tn_, tk_):
        return 4 * (2 * (tm_ * tk_ + 2 * tk_ * tn_ + tk_ + 2 * tn_)
                    + 2 * tm_ * tn_
                    + tm_ * tn_
                    + tm_ * tk_
                    + 2 * tm_ * tn_)

    while need(tm, tn, tk) > limit and tk > 128:
        tk = max(128, _round_up(tk // 2, 128))
        Kp = _round_up(in_f, tk)
    while need(tm, tn, tk) > limit and tn > 128:
        tn = max(128, _round_up(tn // 2, 128))
        Np = _round_up(out_f, tn)

    # v7x has two TensorCores; make sure the "parallel" (M, N) axes have at
    # least two grid points whenever the problem can be split.
    if (Bp // tm) * (Np // tn) < 2:
        if Np >= 256:
            tn = max(128, ((Np // 2) // 128) * 128)
            Np = _round_up(out_f, tn)
        elif Bp >= 2 * sublane:
            tm = max(sublane, ((Bp // 2) // sublane) * sublane)
            Bp = _round_up(B, tm)

    return tm, tn, tk, Bp, Np, Kp


def noisy_linear_kernel(x_ref, mu_wt_ref, sig_wt_ref, eps_in_ref, eps_out_ref,
                        b_ref, o_ref, acc_ref):
    """One (i, j, k) grid step of
         y = x @ mu_w.T + ((x * eps_in) @ sig_w.T) * eps_out + b
       with weights pre-transposed to (K, N) tiles (plain NN contraction)."""
    k = pl.program_id(2)

    @pl.when(k == 0)
    def _init():
        acc_ref[...] = jnp.zeros_like(acc_ref)

    x = x_ref[...]
    mu_part = jnp.dot(x, mu_wt_ref[...], preferred_element_type=jnp.float32)
    sig_part = jnp.dot(x * eps_in_ref[...], sig_wt_ref[...],
                       preferred_element_type=jnp.float32)
    # eps_out scales the output (N) dim, so it can be applied per-K partial sum.
    acc_ref[...] += mu_part + sig_part * eps_out_ref[...]

    @pl.when(k == pl.num_programs(2) - 1)
    def _finalize():
        o_ref[...] = (acc_ref[...] + b_ref[...]).astype(o_ref.dtype)


def prepare_noisy_linear(mu_w, sig_w, mu_b, sig_b, eps_in, eps_out,
                         *, Np, Kp, dtype=jnp.float32):
    """One-time (per parameter / noise update) packing:
       * fold the noisy bias into a single (1, Np) f32 row,
       * transpose weights to (in_f, out_f) and zero-pad to (Kp, Np),
       * cast weights / eps_in to the compute dtype (bf16 halves HBM bytes;
         the kernel keeps an f32 accumulator and f32 epilogue either way)."""
    out_f, in_f = mu_w.shape

    def pad2(a, r, c):
        pr, pc = r - a.shape[0], c - a.shape[1]
        return a if (pr == 0 and pc == 0) else jnp.pad(a, ((0, pr), (0, pc)))

    mu_wt = pad2(mu_w.T.astype(dtype), Kp, Np)
    sig_wt = pad2(sig_w.T.astype(dtype), Kp, Np)
    eps_in_row = pad2(eps_in.reshape(1, in_f).astype(dtype), 1, Kp)
    eps_out_row = pad2(eps_out.reshape(1, out_f).astype(jnp.float32), 1, Np)
    b_row = pad2((mu_b + sig_b * eps_out).reshape(1, out_f).astype(jnp.float32),
                 1, Np)
    return mu_wt, sig_wt, eps_in_row, eps_out_row, b_row


@functools.partial(jax.jit, static_argnames=("tm", "tn", "tk", "out_f"))
def noisy_linear_apply(x, mu_wt, sig_wt, eps_in_row, eps_out_row, b_row,
                       *, tm, tn, tk, out_f):
    """Per-call path: only x is padded here (cheap); weights are pre-packed."""
    B, in_f = x.shape
    Kp, Np = mu_wt.shape
    Bp = _round_up(B, tm)

    x = x.astype(mu_wt.dtype)
    if Bp != B or Kp != in_f:
        x = jnp.pad(x, ((0, Bp - B), (0, Kp - in_f)))

    grid = (Bp // tm, Np // tn, Kp // tk)

    out_p = pl.pallas_call(
        noisy_linear_kernel,
        out_shape=jax.ShapeDtypeStruct((Bp, Np), x.dtype),
        grid_spec=pltpu.PrefetchScalarGridSpec(
            num_scalar_prefetch=0,
            grid=grid,
            in_specs=[
                pl.BlockSpec((tm, tk), lambda i, j, k: (i, k)),   # x
                pl.BlockSpec((tk, tn), lambda i, j, k: (k, j)),   # mu_w.T
                pl.BlockSpec((tk, tn), lambda i, j, k: (k, j)),   # sig_w.T
                pl.BlockSpec((1, tk), lambda i, j, k: (0, k)),    # eps_in row
                pl.BlockSpec((1, tn), lambda i, j, k: (0, j)),    # eps_out row
                pl.BlockSpec((1, tn), lambda i, j, k: (0, j)),    # noisy bias
            ],
            out_specs=pl.BlockSpec((tm, tn), lambda i, j, k: (i, j)),
            scratch_shapes=[pltpu.VMEM((tm, tn), jnp.float32)],
        ),
        compiler_params=pltpu.CompilerParams(
            dimension_semantics=("parallel", "parallel", "arbitrary"),
            vmem_limit_bytes=_vmem_limit_bytes(),
        ),
    )(x, mu_wt, sig_wt, eps_in_row, eps_out_row, b_row)

    return out_p[:B, :out_f]


def noisy_linear(x, mu_w, sig_w, mu_b, sig_b, eps_in, eps_out,
                 *, dtype=jnp.float32, bm=256, bn=512, bk=2048):
    """Convenience one-shot wrapper: prepare (pad/transpose/fold) then apply.
    For repeated forward passes, call prepare_noisy_linear once and reuse."""
    B, in_f = x.shape
    out_f = mu_w.shape[0]
    sublane = 16 if jnp.dtype(dtype) == jnp.dtype(jnp.bfloat16) else 8
    tm, tn, tk, _, Np, Kp = _choose_tiles(B, in_f, out_f,
                                          bm=bm, bn=bn, bk=bk, sublane=sublane)
    packed = prepare_noisy_linear(mu_w, sig_w, mu_b, sig_b, eps_in, eps_out,
                                  Np=Np, Kp=Kp, dtype=dtype)
    return noisy_linear_apply(x, *packed, tm=tm, tn=tn, tk=tk, out_f=out_f)


def _factorised_noise(key, size):
    # torch: x = randn(size); x.sign() * x.abs().sqrt()
    x = jax.random.normal(key, (size,), dtype=jnp.float32)
    return jnp.sign(x) * jnp.sqrt(jnp.abs(x))


def init_noisy_linear(key, in_f, out_f, sigma_init=0.5):
    k_mu_w, k_mu_b, k_eps_in, k_eps_out = jax.random.split(key, 4)
    bound = 1.0 / jnp.sqrt(jnp.float32(in_f))
    mu_w = jax.random.uniform(k_mu_w, (out_f, in_f), jnp.float32,
                              minval=-bound, maxval=bound)
    mu_b = jax.random.uniform(k_mu_b, (out_f,), jnp.float32,
                              minval=-bound, maxval=bound)
    sig_w = jnp.full((out_f, in_f), sigma_init / jnp.sqrt(jnp.float32(in_f)),
                     dtype=jnp.float32)
    sig_b = jnp.full((out_f,), sigma_init / jnp.sqrt(jnp.float32(out_f)),
                     dtype=jnp.float32)
    eps_in = _factorised_noise(k_eps_in, in_f)
    eps_out = _factorised_noise(k_eps_out, out_f)
    return mu_w, sig_w, mu_b, sig_b, eps_in, eps_out


def _reference(x, mu_w, sig_w, mu_b, sig_b, eps_in, eps_out):
    w = mu_w + sig_w * eps_out[:, None] * eps_in[None, :]
    b = mu_b + sig_b * eps_out
    return x @ w.T + b


if __name__ == "__main__":
    key = jax.random.PRNGKey(0)
    k_param, k_x, k_param2, k_x2 = jax.random.split(key, 4)

    # Small case (toy PyTorch shapes): single-tile grid.
    B, IN_F, OUT_F = 8, 32, 64
    params = init_noisy_linear(k_param, IN_F, OUT_F, sigma_init=0.5)
    x = jax.random.normal(k_x, (B, IN_F), dtype=jnp.float32)
    y = jax.block_until_ready(noisy_linear(x, *params))
    y_ref = _reference(x, *params)
    assert y.shape == (B, OUT_F)
    assert jnp.allclose(y, y_ref, atol=2e-4, rtol=2e-4), \
        float(jnp.max(jnp.abs(y - y_ref)))

    # Medium case: exercises N tiling, M/N/K padding and (with bk=128 forced)
    # the multi-step K accumulator path.
    B2, IN_F2, OUT_F2 = 48, 160, 272
    params2 = init_noisy_linear(k_param2, IN_F2, OUT_F2, sigma_init=0.5)
    x2 = jax.random.normal(k_x2, (B2, IN_F2), dtype=jnp.float32)
    y2 = jax.block_until_ready(noisy_linear(x2, *params2, bk=128))
    y2_ref = _reference(x2, *params2)
    assert y2.shape == (B2, OUT_F2)
    assert jnp.allclose(y2, y2_ref, atol=2e-4, rtol=2e-4), \
        float(jnp.max(jnp.abs(y2 - y2_ref)))

    # bf16 compute path (f32 accumulator): smoke test with loose tolerance.
    y2_bf = jax.block_until_ready(
        noisy_linear(x2, *params2, dtype=jnp.bfloat16))
    assert y2_bf.shape == (B2, OUT_F2)
    assert bool(jnp.all(jnp.isfinite(y2_bf.astype(jnp.float32))))
    assert jnp.allclose(y2_bf.astype(jnp.float32), y2_ref,
                        atol=1e-1, rtol=1e-1)

    print("KERNEL_OK")
</pallas_src>

<mosaic_0001>
module attributes {stable_mosaic.version = 11 : i64} {
  func.func @noisy_linear_kernel(%arg0: i32, %arg1: i32, %arg2: i32, %arg3: memref<8x128xf32, #tpu.memory_space<vmem>>, %arg4: memref<128x128xf32, #tpu.memory_space<vmem>>, %arg5: memref<128x128xf32, #tpu.memory_space<vmem>>, %arg6: memref<1x128xf32, #tpu.memory_space<vmem>>, %arg7: memref<1x128xf32, #tpu.memory_space<vmem>>, %arg8: memref<1x128xf32, #tpu.memory_space<vmem>>, %arg9: memref<8x128xf32, #tpu.memory_space<vmem>>, %arg10: memref<8x128xf32, #tpu.memory_space<vmem>>) attributes {dimension_semantics = [#tpu.dimension_semantics<parallel>, #tpu.dimension_semantics<parallel>, #tpu.dimension_semantics<arbitrary>], iteration_bounds = array<i64: 1, 1, 1>, scalar_prefetch = 0 : i64, scratch_operands = 1 : i64, tpu.core_type = #tpu.core_type<tc>, window_params = [{transform_indices = @transform_0, window_bounds = array<i64: 8, 128>}, {transform_indices = @transform_1, window_bounds = array<i64: 128, 128>}, {transform_indices = @transform_2, window_bounds = array<i64: 128, 128>}, {transform_indices = @transform_3, window_bounds = array<i64: 1, 128>}, {transform_indices = @transform_4, window_bounds = array<i64: 1, 128>}, {transform_indices = @transform_5, window_bounds = array<i64: 1, 128>}, {transform_indices = @transform_6, window_bounds = array<i64: 8, 128>}]} {
    %c0_i32 = arith.constant 0 : i32
    %0 = arith.cmpi eq, %arg2, %c0_i32 : i32
    %1 = arith.extui %0 : i1 to i32
    %c0_i32_0 = arith.constant 0 : i32
    %2 = arith.cmpi ne, %1, %c0_i32_0 : i32
    scf.if %2 {
      %cst_17 = arith.constant 0.000000e+00 : f32
      %21 = vector.broadcast %cst_17 : f32 to vector<8x128xf32>
      %c0_18 = arith.constant 0 : index
      %c0_19 = arith.constant 0 : index
      %22 = vector.load %arg10[%c0_18, %c0_19] : memref<8x128xf32, #tpu.memory_space<vmem>>, vector<8x128xf32>
      tpu.vector_store %arg10[%c0_18, %c0_19], %21 {strides = array<i32>} : memref<8x128xf32, #tpu.memory_space<vmem>>, vector<8x128xf32>,
    } else {
    }
    %c0 = arith.constant 0 : index
    %c0_1 = arith.constant 0 : index
    %3 = vector.load %arg3[%c0, %c0_1] : memref<8x128xf32, #tpu.memory_space<vmem>>, vector<8x128xf32>
    %c0_2 = arith.constant 0 : index
    %c0_3 = arith.constant 0 : index
    %4 = vector.load %arg4[%c0_2, %c0_3] : memref<128x128xf32, #tpu.memory_space<vmem>>, vector<128x128xf32>
    %cst = arith.constant dense<0.000000e+00> : vector<8x128xf32>
    %5 = tpu.matmul %3, %4, %cst {dimension_numbers = #tpu.dot_dimension_numbers<[1], [0], [0], [1], [0, 0, 1, 1], [], []>} : vector<8x128xf32>, vector<128x128xf32>, vector<8x128xf32> -> vector<8x128xf32>
    %c0_4 = arith.constant 0 : index
    %c0_5 = arith.constant 0 : index
    %6 = vector.load %arg6[%c0_4, %c0_5] : memref<1x128xf32, #tpu.memory_space<vmem>>, vector<1x128xf32>
    %7 = vector.broadcast %6 : vector<1x128xf32> to vector<8x128xf32>
    %8 = arith.mulf %3, %7 : vector<8x128xf32>
    %c0_6 = arith.constant 0 : index
    %c0_7 = arith.constant 0 : index
    %9 = vector.load %arg5[%c0_6, %c0_7] : memref<128x128xf32, #tpu.memory_space<vmem>>, vector<128x128xf32>
    %cst_8 = arith.constant dense<0.000000e+00> : vector<8x128xf32>
    %10 = tpu.matmul %8, %9, %cst_8 {dimension_numbers = #tpu.dot_dimension_numbers<[1], [0], [0], [1], [0, 0, 1, 1], [], []>} : vector<8x128xf32>, vector<128x128xf32>, vector<8x128xf32> -> vector<8x128xf32>
    %c0_9 = arith.constant 0 : index
    %c0_10 = arith.constant 0 : index
    %11 = vector.load %arg10[%c0_9, %c0_10] : memref<8x128xf32, #tpu.memory_space<vmem>>, vector<8x128xf32>
    %c0_11 = arith.constant 0 : index
    %c0_12 = arith.constant 0 : index
    %12 = vector.load %arg7[%c0_11, %c0_12] : memref<1x128xf32, #tpu.memory_space<vmem>>, vector<1x128xf32>
    %13 = vector.broadcast %12 : vector<1x128xf32> to vector<8x128xf32>
    %14 = arith.mulf %10, %13 : vector<8x128xf32>
    %15 = arith.addf %5, %14 : vector<8x128xf32>
    %16 = arith.addf %11, %15 : vector<8x128xf32>
    %c0_13 = arith.constant 0 : index
    %c0_14 = arith.constant 0 : index
    %17 = vector.load %arg10[%c0_13, %c0_14] : memref<8x128xf32, #tpu.memory_space<vmem>>, vector<8x128xf32>
    tpu.vector_store %arg10[%c0_13, %c0_14], %16 {strides = array<i32>} : memref<8x128xf32, #tpu.memory_space<vmem>>, vector<8x128xf32>,
    %c0_i32_15 = arith.constant 0 : i32
    %18 = arith.cmpi eq, %arg2, %c0_i32_15 : i32
    %19 = arith.extui %18 : i1 to i32
    %c0_i32_16 = arith.constant 0 : i32
    %20 = arith.cmpi ne, %19, %c0_i32_16 : i32
    scf.if %20 {
      %c0_17 = arith.constant 0 : index
      %c0_18 = arith.constant 0 : index
      %21 = vector.load %arg10[%c0_17, %c0_18] : memref<8x128xf32, #tpu.memory_space<vmem>>, vector<8x128xf32>
      %c0_19 = arith.constant 0 : index
      %c0_20 = arith.constant 0 : index
      %22 = vector.load %arg8[%c0_19, %c0_20] : memref<1x128xf32, #tpu.memory_space<vmem>>, vector<1x128xf32>
      %23 = vector.broadcast %22 : vector<1x128xf32> to vector<8x128xf32>
      %24 = arith.addf %21, %23 : vector<8x128xf32>
      %c0_21 = arith.constant 0 : index
      %c0_22 = arith.constant 0 : index
      %25 = vector.load %arg9[%c0_21, %c0_22] : memref<8x128xf32, #tpu.memory_space<vmem>>, vector<8x128xf32>
      tpu.vector_store %arg9[%c0_21, %c0_22], %24 {strides = array<i32>} : memref<8x128xf32, #tpu.memory_space<vmem>>, vector<8x128xf32>,
    } else {
    }
    return
  }
  func.func @transform_0(%arg0: i32, %arg1: i32, %arg2: i32) -> (i32, i32) {
    %c0_i32 = arith.constant 0 : i32
    return %arg0, %arg2 : i32, i32
  }
  func.func @transform_1(%arg0: i32, %arg1: i32, %arg2: i32) -> (i32, i32) {
    %c0_i32 = arith.constant 0 : i32
    return %arg2, %arg1 : i32, i32
  }
  func.func @transform_2(%arg0: i32, %arg1: i32, %arg2: i32) -> (i32, i32) {
    %c0_i32 = arith.constant 0 : i32
    return %arg2, %arg1 : i32, i32
  }
  func.func @transform_3(%arg0: i32, %arg1: i32, %arg2: i32) -> (i32, i32) {
    %c0_i32 = arith.constant 0 : i32
    %c0_i32_0 = arith.constant 0 : i32
    return %c0_i32, %arg2 : i32, i32
  }
  func.func @transform_4(%arg0: i32, %arg1: i32, %arg2: i32) -> (i32, i32) {
    %c0_i32 = arith.constant 0 : i32
    %c0_i32_0 = arith.constant 0 : i32
    return %c0_i32, %arg1 : i32, i32
  }
  func.func @transform_5(%arg0: i32, %arg1: i32, %arg2: i32) -> (i32, i32) {
    %c0_i32 = arith.constant 0 : i32
    %c0_i32_0 = arith.constant 0 : i32
    return %c0_i32, %arg1 : i32, i32
  }
  func.func @transform_6(%arg0: i32, %arg1: i32, %arg2: i32) -> (i32, i32) {
    %c0_i32 = arith.constant 0 : i32
    return %arg0, %arg1 : i32, i32
  }
}

</mosaic_0001>

<llo_original>
// kernel: noisy_linear_apply.1
$region0: #{noisy_linear_apply.1}
  #allocation0 [shape = 'u32[]', space=smem, size = 0x4, offset = 0x4, fixed_abs, tag = 'smem constant byte address 0x4 - core index']
  #allocation1 [shape = 'u32[144,128]{1,0:T(1,128)}', space=vmem, size = 0x12000, scoped, tag = 'internal scratch']
  #allocation2 [shape = 'f32[8,128]{1,0:T(8,128)}', space=vmem, size = 0x1000, scoped, tag = 'scratch operand']
  %s0 = inlined_call_operand.vmem [shape: f32[8,128], index: 0, kind: input, shape index: {}]
  %s1 = inlined_call_operand.hbm [shape: f32[128,128], index: 1, kind: input, shape index: {}]
  %s2 = inlined_call_operand.hbm [shape: f32[128,128], index: 2, kind: input, shape index: {}]
  %s3 = inlined_call_operand.vmem [shape: f32[1,128], index: 3, kind: input, shape index: {}]
  %s4 = inlined_call_operand.vmem [shape: f32[1,128], index: 4, kind: input, shape index: {}]
  %s5 = inlined_call_operand.vmem [shape: f32[1,128], index: 5, kind: input, shape index: {}]
  %s6 = inlined_call_operand.hbm [shape: f32[8,128], index: 6, kind: output, shape index: {}]
  %s7 = sld [smem:[#allocation0]]
  $region50: #{noisy_linear_apply.1} parent=0
    _
  %s9 = ssub.s32 1, %s7
  %s10 = scalar_select 0, %s9, %s7
  $region1: #{noisy_linear_apply.1} parent=0
    #allocation3 [shape = 'u8[65536]{0}', space=vmem, size = 0x10000, scoped, tag = 'input window, operand 1, single buffered']
    #allocation4 [shape = 's32[1]{0}', space=sflag, size = 0x4, scoped, tag = 'scoped memory for noisy_linear_apply.1']
    #allocation5 [shape = 's32[1]{0}', space=sflag, size = 0x4, scoped, tag = 'scoped memory for noisy_linear_apply.1']
    #allocation6 [shape = 'u8[65536]{0}', space=vmem, size = 0x10000, scoped, tag = 'input window, operand 2, single buffered']
    #allocation7 [shape = 's32[1]{0}', space=sflag, size = 0x4, scoped, tag = 'scoped memory for noisy_linear_apply.1']
    #allocation8 [shape = 'u8[4096]{0}', space=vmem, size = 0x1000, scoped, tag = 'output window, operand 0, single buffered']
    %11 = vsyncpa [#allocation4], 0
    %12 = vsyncpa [#allocation7], 0
    %13 = vsyncpa [#allocation5], 0
    // Predicated region
    $region2: #{noisy_linear_apply.1} parent=1 // pred_check
      _
    $region3: #{noisy_linear_apply.1} parent=1 // pred_check_branch
      %15 = sbr.rel (0) target = $region5
    $region4: #{noisy_linear_apply.1} parent=1 // pred_region
      _
    $region5: #{noisy_linear_apply.1} parent=1 // pred_fallthru
      _
    // Predicated region
    $region6: #{noisy_linear_apply.1} parent=1 // pred_check
      _
    $region7: #{noisy_linear_apply.1} parent=1 // pred_check_branch
      %17 = sbr.rel (0) target = $region9
    $region8: #{noisy_linear_apply.1} parent=1 // pred_region
      %s19 = ssub.s32 2048, 2048
      %20 = vsyncadd [#allocation4], %s19
      %s21 = sshll.u32 [#allocation3], 4
      %s22 = int_to_ptr.vmem [resolvable:$true] %s21
      %27 = dma.hbm_to_vmem [thread:$0]  %s1, 2048, %s22, [#allocation4], 128, 128, 8
    $region9: #{noisy_linear_apply.1} parent=1 // pred_fallthru
      _
    // Predicated region
    $region10: #{noisy_linear_apply.1} parent=1 // pred_check
      _
    $region11: #{noisy_linear_apply.1} parent=1 // pred_check_branch
      %29 = sbr.rel (0) target = $region13
    $region12: #{noisy_linear_apply.1} parent=1 // pred_region
      %s31 = ssub.s32 2048, 2048
      %32 = vsyncadd [#allocation7], %s31
      %s33 = sshll.u32 [#allocation6], 4
      %s34 = int_to_ptr.vmem [resolvable:$true] %s33
      %39 = dma.hbm_to_vmem [thread:$0]  %s2, 2048, %s34, [#allocation7], 128, 128, 8
    $region13: #{noisy_linear_apply.1} parent=1 // pred_fallthru
      _
    // Predicated region
    $region14: #{noisy_linear_apply.1} parent=1 // pred_check
      _
    $region15: #{noisy_linear_apply.1} parent=1 // pred_check_branch
      %41 = sbr.rel (0) target = $region17
    $region16: #{noisy_linear_apply.1} parent=1 // pred_region
      _
    $region17: #{noisy_linear_apply.1} parent=1 // pred_fallthru
      _
    // Predicated region
    $region18: #{noisy_linear_apply.1} parent=1 // pred_check
      _
    $region19: #{noisy_linear_apply.1} parent=1 // pred_check_branch
      %43 = sbr.rel (0) target = $region21
    $region20: #{noisy_linear_apply.1} parent=1 // pred_region
      _
    $region21: #{noisy_linear_apply.1} parent=1 // pred_fallthru
      _
    // Predicated region
    $region22: #{noisy_linear_apply.1} parent=1 // pred_check
      _
    $region23: #{noisy_linear_apply.1} parent=1 // pred_check_branch
      %45 = sbr.rel (0) target = $region25
    $region24: #{noisy_linear_apply.1} parent=1 // pred_region
      _
    $region25: #{noisy_linear_apply.1} parent=1 // pred_fallthru
      _
    // Predicated region
    $region26: #{noisy_linear_apply.1} parent=1 // pred_check
      _
    $region27: #{noisy_linear_apply.1} parent=1 // pred_check_branch
      %47 = sbr.rel (0) target = $region29
    $region28: #{noisy_linear_apply.1} parent=1 // pred_region
      %48 = dma.done [#allocation4], 2048
    $region29: #{noisy_linear_apply.1} parent=1 // pred_fallthru
      _
    // Predicated region
    $region30: #{noisy_linear_apply.1} parent=1 // pred_check
      _
    $region31: #{noisy_linear_apply.1} parent=1 // pred_check_branch
      %50 = sbr.rel (0) target = $region33
    $region32: #{noisy_linear_apply.1} parent=1 // pred_region
      %51 = dma.done [#allocation7], 2048
    $region33: #{noisy_linear_apply.1} parent=1 // pred_fallthru
      _
    %p52 = scmp.eq.s32.totalorder 0, 0
    // Predicated region
    $region34: #{noisy_linear_apply.1} parent=1 // pred_check
      %p53 = pneg %p52
    $region35: #{noisy_linear_apply.1} parent=1 // pred_check_branch
      %55 = sbr.rel (%p53) target = $region37
    $region36: #{noisy_linear_apply.1} parent=1 // pred_region
      %56 = vst [vmem:[#allocation2] sm:$0xff] 0.0
    $region37: #{noisy_linear_apply.1} parent=1 // pred_fallthru
      _
    %v57 = vld [vmem:[%s0] sm:$0xff]
    %v58 = vld [vmem:[#allocation3] sm:$0xff]
    %v59 = vld [vmem:[#allocation3 + $0x8] sm:$0xff]
    %v60 = vld [vmem:[#allocation3 + $0x10] sm:$0xff]
    %v61 = vld [vmem:[#allocation3 + $0x18] sm:$0xff]
    %v62 = vld [vmem:[#allocation3 + $0x20] sm:$0xff]
    %v63 = vld [vmem:[#allocation3 + $0x28] sm:$0xff]
    %v64 = vld [vmem:[#allocation3 + $0x30] sm:$0xff]
    %v65 = vld [vmem:[#allocation3 + $0x38] sm:$0xff]
    %v66 = vld [vmem:[#allocation3 + $0x40] sm:$0xff]
    %v67 = vld [vmem:[#allocation3 + $0x48] sm:$0xff]
    %v68 = vld [vmem:[#allocation3 + $0x50] sm:$0xff]
    %v69 = vld [vmem:[#allocation3 + $0x58] sm:$0xff]
    %v70 = vld [vmem:[#allocation3 + $0x60] sm:$0xff]
    %v71 = vld [vmem:[#allocation3 + $0x68] sm:$0xff]
    %v72 = vld [vmem:[#allocation3 + $0x70] sm:$0xff]
    %v73 = vld [vmem:[#allocation3 + $0x78] sm:$0xff]
    %v74 = vld [vmem:[%s3] sm:$0x1]
    %v76 = vlaneseq
    %v77 = vshrl.u32 %v76, 7
    %v78 = vsub.s32 0, %v77
    %v79 = vrot.slane %v74, %v78
    %v81 = vmul.f32 %v57, %v79
    %v82 = vld [vmem:[#allocation6] sm:$0xff]
    %v83 = vld [vmem:[#allocation6 + $0x8] sm:$0xff]
    %v84 = vld [vmem:[#allocation6 + $0x10] sm:$0xff]
    %v85 = vld [vmem:[#allocation6 + $0x18] sm:$0xff]
    %v86 = vld [vmem:[#allocation6 + $0x20] sm:$0xff]
    %v87 = vld [vmem:[#allocation6 + $0x28] sm:$0xff]
    %v88 = vld [vmem:[#allocation6 + $0x30] sm:$0xff]
    %v89 = vld [vmem:[#allocation6 + $0x38] sm:$0xff]
    %v90 = vld [vmem:[#allocation6 + $0x40] sm:$0xff]
    %v91 = vld [vmem:[#allocation6 + $0x48] sm:$0xff]
    %v92 = vld [vmem:[#allocation6 + $0x50] sm:$0xff]
    %v93 = vld [vmem:[#allocation6 + $0x58] sm:$0xff]
    %v94 = vld [vmem:[#allocation6 + $0x60] sm:$0xff]
    %v95 = vld [vmem:[#allocation6 + $0x68] sm:$0xff]
    %v96 = vld [vmem:[#allocation6 + $0x70] sm:$0xff]
    %v97 = vld [vmem:[#allocation6 + $0x78] sm:$0xff]
    %98 = vmatprep.subr.mxu0 0.0
    %99 = vmatpush1.msra.mxu0 %v97
    %100 = vmatprep.subr.mxu0 0.0
    %101 = vmatpush1.msra.mxu0 %v96
    %102 = vmatprep.subr.mxu0 0.0
    %103 = vmatpush1.msra.mxu0 %v95
    %104 = vmatprep.subr.mxu0 0.0
    %105 = vmatpush1.msra.mxu0 %v94
    %106 = vmatprep.subr.mxu0 0.0
    %107 = vmatpush1.msra.mxu0 %v93
    %108 = vmatprep.subr.mxu0 0.0
    %109 = vmatpush1.msra.mxu0 %v92
    %110 = vmatprep.subr.mxu0 0.0
    %111 = vmatpush1.msra.mxu0 %v91
    %112 = vmatprep.subr.mxu0 0.0
    %113 = vmatpush1.msra.mxu0 %v90
    %114 = vmatprep.subr.mxu0 0.0
    %115 = vmatpush1.msra.mxu0 %v89
    %116 = vmatprep.subr.mxu0 0.0
    %117 = vmatpush1.msra.mxu0 %v88
    %118 = vmatprep.subr.mxu0 0.0
    %119 = vmatpush1.msra.mxu0 %v87
    %120 = vmatprep.subr.mxu0 0.0
    %121 = vmatpush1.msra.mxu0 %v86
    %122 = vmatprep.subr.mxu0 0.0
    %123 = vmatpush1.msra.mxu0 %v85
    %124 = vmatprep.subr.mxu0 0.0
    %125 = vmatpush1.msra.mxu0 %v84
    %126 = vmatprep.subr.mxu0 0.0
    %127 = vmatpush1.msra.mxu0 %v83
    %128 = vmatprep.subr.mxu0 0.0
    %129 = vmatpush1.msra.mxu0 %v82
    %130 = vmatprep.subr.mxu0 0.0
    %131 = vmatpush2.msra.mxu0 0.0
    %132 = vmatprep.subr.mxu0 0.0
    %133 = vmatpush2.msra.mxu0 0.0
    %134 = vmatprep.subr.mxu0 0.0
    %135 = vmatpush2.msra.mxu0 0.0
    %136 = vmatprep.subr.mxu0 0.0
    %137 = vmatpush2.msra.mxu0 0.0
    %138 = vmatprep.subr.mxu0 0.0
    %139 = vmatpush2.msra.mxu0 0.0
    %140 = vmatprep.subr.mxu0 0.0
    %141 = vmatpush2.msra.mxu0 0.0
    %142 = vmatprep.subr.mxu0 0.0
    %143 = vmatpush2.msra.mxu0 0.0
    %144 = vmatprep.subr.mxu0 0.0
    %145 = vmatpush2.msra.mxu0 0.0
    %146 = vmatprep.subr.mxu0 0.0
    %147 = vmatpush2.msra.mxu0 0.0
    %148 = vmatprep.subr.mxu0 0.0
    %149 = vmatpush2.msra.mxu0 0.0
    %150 = vmatprep.subr.mxu0 0.0
    %151 = vmatpush2.msra.mxu0 0.0
    %152 = vmatprep.subr.mxu0 0.0
    %153 = vmatpush2.msra.mxu0 0.0
    %154 = vmatprep.subr.mxu0 0.0
    %155 = vmatpush2.msra.mxu0 0.0
    %156 = vmatprep.subr.mxu0 0.0
    %157 = vmatpush2.msra.mxu0 0.0
    %158 = vmatprep.subr.mxu0 0.0
    %159 = vmatpush2.msra.mxu0 0.0
    %160 = vmatprep.subr.mxu0 0.0
    %161 = vmatpush2.msra.mxu0 0.0
    %162 = vmatprep.mubr.f32.mxu0 0.0
    %163 = vmatmul.mubr.f32.gmra.mxu0 %v81
    %v164 = vpop.f32.mrf.mxu0
    %v165 = vadd.f32 0.0, %v164
    %v166 = vpop.f32.mrf.mxu0
    %167 = vdwg.mxu0
    %v168 = vld [vmem:[#allocation2] sm:$0xff]
    %v169 = vld [vmem:[%s4] sm:$0x1]
    %v171 = vlaneseq
    %v172 = vshrl.u32 %v171, 7
    %v173 = vsub.s32 0, %v172
    %v174 = vrot.slane %v169, %v173
    %v176 = vmul.f32 %v165, %v174
    %177 = vmatprep.subr.mxu0 0.0
    %178 = vmatpush1.msra.mxu0 %v73
    %179 = vmatprep.subr.mxu0 0.0
    %180 = vmatpush1.msra.mxu0 %v72
    %181 = vmatprep.subr.mxu0 0.0
    %182 = vmatpush1.msra.mxu0 %v71
    %183 = vmatprep.subr.mxu0 0.0
    %184 = vmatpush1.msra.mxu0 %v70
    %185 = vmatprep.subr.mxu0 0.0
    %186 = vmatpush1.msra.mxu0 %v69
    %187 = vmatprep.subr.mxu0 0.0
    %188 = vmatpush1.msra.mxu0 %v68
    %189 = vmatprep.subr.mxu0 0.0
    %190 = vmatpush1.msra.mxu0 %v67
    %191 = vmatprep.subr.mxu0 0.0
    %192 = vmatpush1.msra.mxu0 %v66
    %193 = vmatprep.subr.mxu0 0.0
    %194 = vmatpush1.msra.mxu0 %v65
    %195 = vmatprep.subr.mxu0 0.0
    %196 = vmatpush1.msra.mxu0 %v64
    %197 = vmatprep.subr.mxu0 0.0
    %198 = vmatpush1.msra.mxu0 %v63
    %199 = vmatprep.subr.mxu0 0.0
    %200 = vmatpush1.msra.mxu0 %v62
    %201 = vmatprep.subr.mxu0 0.0
    %202 = vmatpush1.msra.mxu0 %v61
    %203 = vmatprep.subr.mxu0 0.0
    %204 = vmatpush1.msra.mxu0 %v60
    %205 = vmatprep.subr.mxu0 0.0
    %206 = vmatpush1.msra.mxu0 %v59
    %207 = vmatprep.subr.mxu0 0.0
    %208 = vmatpush1.msra.mxu0 %v58
    %209 = vmatprep.subr.mxu0 0.0
    %210 = vmatpush2.msra.mxu0 0.0
    %211 = vmatprep.subr.mxu0 0.0
    %212 = vmatpush2.msra.mxu0 0.0
    %213 = vmatprep.subr.mxu0 0.0
    %214 = vmatpush2.msra.mxu0 0.0
    %215 = vmatprep.subr.mxu0 0.0
    %216 = vmatpush2.msra.mxu0 0.0
    %217 = vmatprep.subr.mxu0 0.0
    %218 = vmatpush2.msra.mxu0 0.0
    %219 = vmatprep.subr.mxu0 0.0
    %220 = vmatpush2.msra.mxu0 0.0
    %221 = vmatprep.subr.mxu0 0.0
    %222 = vmatpush2.msra.mxu0 0.0
    %223 = vmatprep.subr.mxu0 0.0
    %224 = vmatpush2.msra.mxu0 0.0
    %225 = vmatprep.subr.mxu0 0.0
    %226 = vmatpush2.msra.mxu0 0.0
    %227 = vmatprep.subr.mxu0 0.0
    %228 = vmatpush2.msra.mxu0 0.0
    %229 = vmatprep.subr.mxu0 0.0
    %230 = vmatpush2.msra.mxu0 0.0
    %231 = vmatprep.subr.mxu0 0.0
    %232 = vmatpush2.msra.mxu0 0.0
    %233 = vmatprep.subr.mxu0 0.0
    %234 = vmatpush2.msra.mxu0 0.0
    %235 = vmatprep.subr.mxu0 0.0
    %236 = vmatpush2.msra.mxu0 0.0
    %237 = vmatprep.subr.mxu0 0.0
    %238 = vmatpush2.msra.mxu0 0.0
    %239 = vmatprep.subr.mxu0 0.0
    %240 = vmatpush2.msra.mxu0 0.0
    %241 = vmatprep.mubr.f32.mxu0 0.0
    %242 = vmatmul.mubr.f32.gmra.mxu0 %v57
    %v243 = vpop.f32.mrf.mxu0
    %v244 = vadd.f32 %v176, %v243
    %v245 = vpop.f32.mrf.mxu0
    %246 = vdwg.mxu0
    %v247 = vadd.f32 %v168, %v244
    %248 = vst [vmem:[#allocation2] sm:$0xff] %v247
    // Predicated region
    $region38: #{noisy_linear_apply.1} parent=1 // pred_check
      %p249 = pneg %p52
    $region39: #{noisy_linear_apply.1} parent=1 // pred_check_branch
      %251 = sbr.rel (%p249) target = $region41
    $region40: #{noisy_linear_apply.1} parent=1 // pred_region
      %v252 = vld [vmem:[#allocation2] sm:$0xff]
      %v253 = vld [vmem:[%s5] sm:$0x1]
      %v255 = vlaneseq
      %v256 = vshrl.u32 %v255, 7
      %v257 = vsub.s32 0, %v256
      %v258 = vrot.slane %v253, %v257
      %v260 = vadd.f32 %v252, %v258
      %261 = vst [vmem:[#allocation8] sm:$0xff] %v260
    $region41: #{noisy_linear_apply.1} parent=1 // pred_fallthru
      _
    // Predicated region
    $region42: #{noisy_linear_apply.1} parent=1 // pred_check
      _
    $region43: #{noisy_linear_apply.1} parent=1 // pred_check_branch
      %263 = sbr.rel (0) target = $region45
    $region44: #{noisy_linear_apply.1} parent=1 // pred_region
      %s265 = ssub.s32 128, 128
      %266 = vsyncadd [#allocation5], %s265
      %s268 = sshll.u32 [#allocation8], 4
      %s269 = int_to_ptr.vmem [resolvable:$true] %s268
      %271 = dma.vmem_to_hbm [thread:$0]  %s269, 128, %s6, [#allocation5]
    $region45: #{noisy_linear_apply.1} parent=1 // pred_fallthru
      _
    // Predicated region
    $region46: #{noisy_linear_apply.1} parent=1 // pred_check
      _
    $region47: #{noisy_linear_apply.1} parent=1 // pred_check_branch
      %273 = sbr.rel (0) target = $region49
    $region48: #{noisy_linear_apply.1} parent=1 // pred_region
      %274 = dma.done [#allocation5], 128
    $region49: #{noisy_linear_apply.1} parent=1 // pred_fallthru
      _
    %275 = vsyncpa [#allocation4], 1
    %276 = vsyncpa [#allocation7], 1
    %277 = vsyncpa [#allocation5], 1

</llo_original>
